<compile_context>
chip_gen: v6e
topology: v6e:2x2x1
jax: 0.10.0
libtpu: 0.0.40
codegen_flags: <defaults>
</compile_context>

<pallas_src>
import jax
import jax.numpy as jnp
from jax.experimental import pallas as pl
from jax.experimental.pallas import tpu as pltpu

_LANE = 128


def _ensemble_sentiment_kernel(emb_ref, mask_ref, w_ref, b_ref, out_ref):
    """One grid step per batch tile.

    emb_ref : [TB, S, H]  bf16  token embeddings (shared by every sub-model)
    mask_ref: [TB, S]     f32   attention mask, lane-dense
    w_ref   : [H, Cp]     f32   ensemble-averaged classifier weight
    b_ref   : [1, Cp]     f32   ensemble-averaged classifier bias
    out_ref : [TB, Cp]    i32   rounded ensemble-mean logits (lane-padded)
    """
    emb = emb_ref[...].astype(jnp.float32)                 # upcast after load
    mask = mask_ref[...]                                    # [TB, S]

    # Masked mean pooling (model-invariant, computed exactly once).
    masked = emb * mask[:, :, None]                         # [TB, S, H]
    denom = jnp.sum(mask, axis=1, keepdims=True) + 1e-9     # [TB, 1]
    pooled = jnp.sum(masked, axis=1) / denom                # [TB, H]
    # TODO(synk): on v7x (3.2 TB/s HBM) move this S-reduction onto the MXU
    # ('bs,bsh->bh' contraction) if the VPU/XLU slot becomes the binding unit.

    # Single lane-dense MXU call with the pre-averaged head.
    logits = jnp.dot(pooled, w_ref[...],
                     preferred_element_type=jnp.float32) + b_ref[...]

    # torch.round(...).int() == round-half-to-even, then int cast.
    out_ref[...] = jnp.round(logits).astype(jnp.int32)


def _pick_batch_tile(B, S, H, *, emb_bytes=2, vmem_budget_bytes=40 << 20):
    """Largest TB (multiple of 8, <= 512) whose double-buffered bf16 embedding
    blocks fit the per-generation VMEM budget.  ~40 MiB keeps v7x (64 MiB
    physical) safe; on v5e/v6e (128 MiB) a larger budget / TB can be used."""
    if B <= 8:
        return B                                           # tiny demo batch
    tb = 8
    while (tb * 2 <= min(B, 512)
           and 2 * (tb * 2) * S * H * emb_bytes <= vmem_budget_bytes):
        tb *= 2
    return tb


def ensemble_predict_sentiment(input_ids, attention_mask, embedding_table,
                               weights, biases):
    """input_ids: [B, S] int32, attention_mask: [B, S] (0/1),
    embedding_table: [V, H] (bf16 preferred), weights: [M, H, C] f32,
    biases: [M, C] f32.  Returns [B, C] int32 — rounded mean of per-model
    logits (== rounded logits of the mean head, by linearity)."""
    B, S = input_ids.shape
    M, H, C = weights.shape
    Cp = ((C + _LANE - 1) // _LANE) * _LANE                 # lane-pad classes

    # Data-dependent embedding gather stays in JAX; stream in bf16 to halve
    # the dominant HBM bytes.
    # TODO(synk): fuse this gather into the kernel (scalar-prefetched ids +
    # manual per-row DMA from an ANY-space table) to kill the [B,S,H] HBM
    # round trip at production vocab sizes.
    emb = jnp.take(embedding_table.astype(jnp.bfloat16), input_ids, axis=0)
    mask = attention_mask.astype(jnp.float32)               # [B, S] lane-dense

    # Ensemble mean folded into the head (exact by linearity).
    w_mean = jnp.mean(weights.astype(jnp.float32), axis=0)  # [H, C]
    b_mean = jnp.mean(biases.astype(jnp.float32), axis=0)   # [C]
    w_pad = jnp.zeros((H, Cp), jnp.float32).at[:, :C].set(w_mean)
    b_pad = jnp.zeros((1, Cp), jnp.float32).at[0, :C].set(b_mean)

    TB = _pick_batch_tile(B, S, H)
    grid = (pl.cdiv(B, TB),)

    out = pl.pallas_call(
        _ensemble_sentiment_kernel,
        out_shape=jax.ShapeDtypeStruct((B, Cp), jnp.int32),
        grid=grid,
        in_specs=[
            pl.BlockSpec((TB, S, H), lambda b: (b, 0, 0)),   # bf16 embeddings
            pl.BlockSpec((TB, S), lambda b: (b, 0)),         # f32 mask
            pl.BlockSpec((H, Cp), lambda b: (0, 0)),         # averaged head W
            pl.BlockSpec((1, Cp), lambda b: (0, 0)),         # averaged head b
        ],
        out_specs=pl.BlockSpec((TB, Cp), lambda b: (b, 0)),  # lane-dense out
        compiler_params=pltpu.CompilerParams(
            dimension_semantics=("parallel",),
            # Above the 32 MiB scoped default (v5e/v6e headroom); tiles are
            # sized by _pick_batch_tile to ~40 MiB so this also fits v7x's
            # 64 MiB physical VMEM.
            vmem_limit_bytes=64 * 1024 * 1024,
        ),
    )(emb, mask, w_pad, b_pad)
    return out[:, :C]


# TODO(synk): predict_paraphrase / predict_similarity reuse the same
# averaged-head single-matmul pattern (similarity drops the round/int cast);
# the sub-models are unspecified, so only the sentiment path is materialized.


def _reference(input_ids, attention_mask, embedding_table, weights, biases):
    """Torch-faithful reference: per-model logits -> mean -> round -> int."""
    emb = jnp.take(embedding_table, input_ids, axis=0).astype(jnp.float32)
    mask = attention_mask.astype(jnp.float32)
    pooled = (emb * mask[:, :, None]).sum(1) / (mask.sum(1, keepdims=True) + 1e-9)
    logits = jnp.einsum("bh,mhc->mbc", pooled, weights.astype(jnp.float32)) \
        + biases.astype(jnp.float32)[:, None, :]
    return jnp.round(jnp.mean(logits, axis=0)).astype(jnp.int32)


if __name__ == "__main__":
    key = jax.random.PRNGKey(0)
    B, S, H, C, M, V = 2, 8, 32, 5, 3, 64  # batch, seq, hidden, classes, models, vocab

    k0, k1, k2, k3 = jax.random.split(key, 4)
    input_ids = jax.random.randint(k0, (B, S), 0, V, dtype=jnp.int32)
    attention_mask = jnp.concatenate(
        [jnp.ones((B, S - 2), jnp.int32), jnp.zeros((B, 2), jnp.int32)], axis=1)
    embedding_table = jax.random.normal(
        k1, (V, H), dtype=jnp.float32).astype(jnp.bfloat16)
    weights = jax.random.normal(k2, (M, H, C), dtype=jnp.float32) * 0.5
    biases = jax.random.normal(k3, (M, C), dtype=jnp.float32) * 0.1

    out = ensemble_predict_sentiment(input_ids, attention_mask,
                                     embedding_table, weights, biases)
    jax.block_until_ready(out)

    ref = _reference(input_ids, attention_mask, embedding_table, weights, biases)
    assert out.shape == (B, C) and out.dtype == jnp.int32
    assert jnp.array_equal(out, ref), (out, ref)
    print("KERNEL_OK")
</pallas_src>

<mosaic_0001>
module attributes {stable_mosaic.version = 11 : i64} {
  func.func @_ensemble_sentiment_kernel(%arg0: i32, %arg1: memref<2x8x32xbf16, #tpu.memory_space<vmem>>, %arg2: memref<2x8xf32, #tpu.memory_space<vmem>>, %arg3: memref<32x128xf32, #tpu.memory_space<vmem>>, %arg4: memref<1x128xf32, #tpu.memory_space<vmem>>, %arg5: memref<2x128xi32, #tpu.memory_space<vmem>>) attributes {dimension_semantics = [#tpu.dimension_semantics<parallel>], iteration_bounds = array<i64: 1>, scalar_prefetch = 0 : i64, scratch_operands = 0 : i64, tpu.core_type = #tpu.core_type<tc>, window_params = [{transform_indices = @transform_0, window_bounds = array<i64: 2, 8, 32>}, {transform_indices = @transform_1, window_bounds = array<i64: 2, 8>}, {pipeline_mode = #tpu.pipeline_mode<synchronous>, transform_indices = @transform_2, window_bounds = array<i64: 32, 128>}, {pipeline_mode = #tpu.pipeline_mode<synchronous>, transform_indices = @transform_3, window_bounds = array<i64: 1, 128>}, {transform_indices = @transform_4, window_bounds = array<i64: 2, 128>}]} {
    %c0 = arith.constant 0 : index
    %c0_0 = arith.constant 0 : index
    %c0_1 = arith.constant 0 : index
    %0 = vector.load %arg1[%c0, %c0_0, %c0_1] : memref<2x8x32xbf16, #tpu.memory_space<vmem>>, vector<2x8x32xbf16>
    %1 = arith.extf %0 : vector<2x8x32xbf16> to vector<2x8x32xf32>
    %c0_2 = arith.constant 0 : index
    %c0_3 = arith.constant 0 : index
    %2 = vector.load %arg2[%c0_2, %c0_3] : memref<2x8xf32, #tpu.memory_space<vmem>>, vector<2x8xf32>
    %3 = vector.shape_cast %2 : vector<2x8xf32> to vector<2x8x1xf32>
    %4 = vector.broadcast %3 : vector<2x8x1xf32> to vector<2x8x32xf32>
    %5 = arith.mulf %1, %4 : vector<2x8x32xf32>
    %cst = arith.constant dense<0.000000e+00> : vector<2xf32>
    %6 = vector.multi_reduction <add>, %2, %cst [1] : vector<2x8xf32> to vector<2xf32>
    %7 = vector.shape_cast %6 : vector<2xf32> to vector<2x1xf32>
    %cst_4 = arith.constant 9.99999971E-10 : f32
    %8 = vector.broadcast %cst_4 : f32 to vector<2x1xf32>
    %9 = arith.addf %7, %8 : vector<2x1xf32>
    %cst_5 = arith.constant dense<0.000000e+00> : vector<2x32xf32>
    %10 = vector.multi_reduction <add>, %5, %cst_5 [1] : vector<2x8x32xf32> to vector<2x32xf32>
    %11 = vector.broadcast %9 : vector<2x1xf32> to vector<2x32xf32>
    %12 = arith.divf %10, %11 : vector<2x32xf32>
    %c0_6 = arith.constant 0 : index
    %c0_7 = arith.constant 0 : index
    %13 = vector.load %arg3[%c0_6, %c0_7] : memref<32x128xf32, #tpu.memory_space<vmem>>, vector<32x128xf32>
    %cst_8 = arith.constant dense<0.000000e+00> : vector<2x128xf32>
    %14 = tpu.matmul %12, %13, %cst_8 {dimension_numbers = #tpu.dot_dimension_numbers<[1], [0], [0], [1], [0, 0, 1, 1], [], []>} : vector<2x32xf32>, vector<32x128xf32>, vector<2x128xf32> -> vector<2x128xf32>
    %c0_9 = arith.constant 0 : index
    %c0_10 = arith.constant 0 : index
    %15 = vector.load %arg4[%c0_9, %c0_10] : memref<1x128xf32, #tpu.memory_space<vmem>>, vector<1x128xf32>
    %16 = vector.broadcast %15 : vector<1x128xf32> to vector<2x128xf32>
    %17 = arith.addf %14, %16 : vector<2x128xf32>
    %18 = math.roundeven %17 : vector<2x128xf32>
    %19 = arith.fptosi %18 : vector<2x128xf32> to vector<2x128xi32>
    %c0_11 = arith.constant 0 : index
    %c0_12 = arith.constant 0 : index
    %20 = vector.load %arg5[%c0_11, %c0_12] : memref<2x128xi32, #tpu.memory_space<vmem>>, vector<2x128xi32>
    tpu.vector_store %arg5[%c0_11, %c0_12], %19 {strides = array<i32>} : memref<2x128xi32, #tpu.memory_space<vmem>>, vector<2x128xi32>,
    return
  }
  func.func @transform_0(%arg0: i32) -> (i32, i32, i32) {
    %c0_i32 = arith.constant 0 : i32
    %c0_i32_0 = arith.constant 0 : i32
    %c0_i32_1 = arith.constant 0 : i32
    return %arg0, %c0_i32, %c0_i32_0 : i32, i32, i32
  }
  func.func @transform_1(%arg0: i32) -> (i32, i32) {
    %c0_i32 = arith.constant 0 : i32
    %c0_i32_0 = arith.constant 0 : i32
    return %arg0, %c0_i32 : i32, i32
  }
  func.func @transform_2(%arg0: i32) -> (i32, i32) {
    %c0_i32 = arith.constant 0 : i32
    %c0_i32_0 = arith.constant 0 : i32
    %c0_i32_1 = arith.constant 0 : i32
    return %c0_i32, %c0_i32_0 : i32, i32
  }
  func.func @transform_3(%arg0: i32) -> (i32, i32) {
    %c0_i32 = arith.constant 0 : i32
    %c0_i32_0 = arith.constant 0 : i32
    %c0_i32_1 = arith.constant 0 : i32
    return %c0_i32, %c0_i32_0 : i32, i32
  }
  func.func @transform_4(%arg0: i32) -> (i32, i32) {
    %c0_i32 = arith.constant 0 : i32
    %c0_i32_0 = arith.constant 0 : i32
    return %arg0, %c0_i32 : i32, i32
  }
}

</mosaic_0001>

<llo_original>
// kernel: tpu_custom_call.1
$region0: #{tpu_custom_call.1}
  #allocation0 [shape = 'u32[]', space=smem, size = 0x4, offset = 0x4, fixed_abs, tag = 'smem constant byte address 0x4 - core index']
  #allocation1 [shape = 'u32[144,128]{1,0:T(1,128)}', space=vmem, size = 0x12000, scoped, tag = 'internal scratch']
  %s0 = inlined_call_operand.hbm [shape: bf16[2,8,32], index: 0, kind: input, shape index: {}]
  %s1 = inlined_call_operand.hbm [shape: f32[2,8], index: 1, kind: input, shape index: {}]
  %s2 = inlined_call_operand.hbm [shape: f32[32,128], index: 2, kind: input, shape index: {}]
  %s3 = inlined_call_operand.vmem [shape: f32[1,128], index: 3, kind: input, shape index: {}]
  %s4 = inlined_call_operand.hbm [shape: s32[2,128], index: 4, kind: output, shape index: {}]
  %s5 = sld [smem:[#allocation0]]
  $region38: #{tpu_custom_call.1} parent=0
    _
  %s7 = ssub.s32 1, %s5
  %s8 = scalar_select 0, %s7, %s5
  $region1: #{tpu_custom_call.1} parent=0
    #allocation2 [shape = 'u8[4096]{0}', space=vmem, size = 0x1000, scoped, tag = 'input window, operand 0, single buffered']
    #allocation3 [shape = 's32[1]{0}', space=sflag, size = 0x4, scoped, tag = 'scoped memory for tpu_custom_call.1']
    #allocation4 [shape = 's32[1]{0}', space=sflag, size = 0x4, scoped, tag = 'scoped memory for tpu_custom_call.1']
    #allocation5 [shape = 'u8[1024]{0}', space=vmem, size = 0x400, scoped, tag = 'input window, operand 1, single buffered']
    #allocation6 [shape = 's32[1]{0}', space=sflag, size = 0x4, scoped, tag = 'scoped memory for tpu_custom_call.1']
    #allocation7 [shape = 'u8[16384]{0}', space=vmem, size = 0x4000, scoped, tag = 'input window, operand 2, single buffered']
    #allocation8 [shape = 'u8[1024]{0}', space=vmem, size = 0x400, scoped, tag = 'output window, operand 0, single buffered']
    %9 = vsyncpa [#allocation3], 0
    %10 = vsyncpa [#allocation6], 0
    %11 = vsyncpa [#allocation4], 0
    // Predicated region
    $region2: #{tpu_custom_call.1} parent=1 // pred_check
      _
    $region3: #{tpu_custom_call.1} parent=1 // pred_check_branch
      %13 = sbr.rel (0) target = $region5
    $region4: #{tpu_custom_call.1} parent=1 // pred_region
      %s15 = ssub.s32 128, 128
      %16 = vsyncadd [#allocation3], %s15
      %s17 = sshll.u32 [#allocation2], 4
      %s18 = int_to_ptr.vmem [resolvable:$true] %s17
      %23 = dma.hbm_to_vmem [thread:$0]  %s0, 128, %s18, [#allocation3], 64, 64, 4
    $region5: #{tpu_custom_call.1} parent=1 // pred_fallthru
      _
    // Predicated region
    $region6: #{tpu_custom_call.1} parent=1 // pred_check
      _
    $region7: #{tpu_custom_call.1} parent=1 // pred_check_branch
      %25 = sbr.rel (0) target = $region9
    $region8: #{tpu_custom_call.1} parent=1 // pred_region
      %s27 = ssub.s32 32, 32
      %28 = vsyncadd [#allocation6], %s27
      %s30 = sshll.u32 [#allocation5], 4
      %s31 = int_to_ptr.vmem [resolvable:$true] %s30
      %33 = dma.hbm_to_vmem [thread:$0]  %s1, 32, %s31, [#allocation6]
    $region9: #{tpu_custom_call.1} parent=1 // pred_fallthru
      _
    // Predicated region
    $region10: #{tpu_custom_call.1} parent=1 // pred_check
      _
    $region11: #{tpu_custom_call.1} parent=1 // pred_check_branch
      %35 = sbr.rel (0) target = $region13
    $region12: #{tpu_custom_call.1} parent=1 // pred_region
      %s37 = ssub.s32 512, 512
      %38 = vsyncadd [#allocation6], %s37
      %s39 = sshll.u32 [#allocation7], 4
      %s40 = int_to_ptr.vmem [resolvable:$true] %s39
      %45 = dma.hbm_to_vmem [thread:$0]  %s2, 512, %s40, [#allocation6], 128, 128, 8
    $region13: #{tpu_custom_call.1} parent=1 // pred_fallthru
      _
    // Predicated region
    $region14: #{tpu_custom_call.1} parent=1 // pred_check
      _
    $region15: #{tpu_custom_call.1} parent=1 // pred_check_branch
      %47 = sbr.rel (0) target = $region17
    $region16: #{tpu_custom_call.1} parent=1 // pred_region
      _
    $region17: #{tpu_custom_call.1} parent=1 // pred_fallthru
      _
    // Predicated region
    $region18: #{tpu_custom_call.1} parent=1 // pred_check
      _
    $region19: #{tpu_custom_call.1} parent=1 // pred_check_branch
      %49 = sbr.rel (0) target = $region21
    $region20: #{tpu_custom_call.1} parent=1 // pred_region
      %50 = dma.done [#allocation3], 128
    $region21: #{tpu_custom_call.1} parent=1 // pred_fallthru
      _
    // Predicated region
    $region22: #{tpu_custom_call.1} parent=1 // pred_check
      _
    $region23: #{tpu_custom_call.1} parent=1 // pred_check_branch
      %52 = sbr.rel (0) target = $region25
    $region24: #{tpu_custom_call.1} parent=1 // pred_region
      %53 = dma.done [#allocation6], 32
    $region25: #{tpu_custom_call.1} parent=1 // pred_fallthru
      _
    // Predicated region
    $region26: #{tpu_custom_call.1} parent=1 // pred_check
      _
    $region27: #{tpu_custom_call.1} parent=1 // pred_check_branch
      %55 = sbr.rel (0) target = $region29
    $region28: #{tpu_custom_call.1} parent=1 // pred_region
      %56 = dma.done [#allocation6], 512
    $region29: #{tpu_custom_call.1} parent=1 // pred_fallthru
      _
    %v57 = vld [vmem:[#allocation2] sm:$0xf]
    %v58 = vld [vmem:[#allocation2 + $0x4] sm:$0xf]
    %v59 = vunpack.c.l.bf16 %v57
    %v60 = vunpack.c.l.bf16 %v58
    %v61 = vld [vmem:[#allocation5] sm:$0x3]
    %v62 = vlaneseq
    %v63 = vshrl.u32 %v62, 7
    %v64 = vsub.s32 0, %v63
    %v65 = vrot.slane %v61, %v64
    %67 = vbcast.lane.b32.xlu0 %v65, 256
    %v68 = vpop.permute.xlu0 %67
    %v69 = vlaneseq
    %v70 = vshrl.u32 %v69, 7
    %v71 = vsub.s32 1, %v70
    %v72 = vrot.slane %v61, %v71
    %74 = vbcast.lane.b32.xlu0 %v72, 256
    %v75 = vpop.permute.xlu0 %74
    %v76 = vmul.f32 %v59, %v68
    %v77 = vmul.f32 %v60, %v75
    %vm78 = vcmask 58368
    %v79 = vsel %vm78, %v61, 0.0
    %80 = vadd.xlane.f32.xlu0 %v79
    %v81 = vpop.xlane.xlu0 %80
    %v82 = vadd.f32 %v81, 1e-09
    %vm83 = vcmask 261120
    %v84 = vsel %vm83, %v76, 0.0
    %v85 = vrot.slane %v84, 4
    %v86 = vadd.f32 %v84, %v85
    %v87 = vrot.slane %v86, 2
    %v88 = vadd.f32 %v86, %v87
    %v89 = vrot.slane %v88, 1
    %v90 = vadd.f32 %v88, %v89
    %v91 = vsel %vm83, %v77, 0.0
    %v92 = vrot.slane %v91, 4
    %v93 = vadd.f32 %v91, %v92
    %v94 = vrot.slane %v93, 2
    %v95 = vadd.f32 %v93, %v94
    %v96 = vrot.slane %v95, 1
    %v97 = vadd.f32 %v95, %v96
    %v99 = vrot.slane %v82, 1
    %v102 = vrcp.pop %v82
    %v103 = vmul.f32 %v90, %v102
    %v104 = vrcp.pop %v99
    %v105 = vmul.f32 %v97, %v104
    %v106 = vld [vmem:[#allocation7] sm:$0xff]
    %v107 = vld [vmem:[#allocation7 + $0x8] sm:$0xff]
    %v108 = vld [vmem:[#allocation7 + $0x10] sm:$0xff]
    %v109 = vld [vmem:[#allocation7 + $0x18] sm:$0xff]
    %v110 = vld [vmem:[%s3] sm:$0x1]
    %v112 = vlaneseq
    %v113 = vshrl.u32 %v112, 7
    %v114 = vsub.s32 0, %v113
    %v115 = vrot.slane %v110, %v114
    %v119 = vrot.slane %v105, 7
    %vm120 = vcmask 1041409
    %v121 = vsel %vm120, %v119, %v103
    %v122 = vsel %vm83, %v121, 0
    %124 = vmatprep.subr.mxu0 0.0
    %125 = vmatpush1.msra.mxu0 0.0
    %126 = vmatprep.subr.mxu0 0.0
    %127 = vmatpush1.msra.mxu0 0.0
    %128 = vmatprep.subr.mxu0 0.0
    %129 = vmatpush1.msra.mxu0 0.0
    %130 = vmatprep.subr.mxu0 0.0
    %131 = vmatpush1.msra.mxu0 0.0
    %132 = vmatprep.subr.mxu0 0.0
    %133 = vmatpush1.msra.mxu0 0.0
    %134 = vmatprep.subr.mxu0 0.0
    %135 = vmatpush1.msra.mxu0 0.0
    %136 = vmatprep.subr.mxu0 0.0
    %137 = vmatpush1.msra.mxu0 0.0
    %138 = vmatprep.subr.mxu0 0.0
    %139 = vmatpush1.msra.mxu0 0.0
    %140 = vmatprep.subr.mxu0 0.0
    %141 = vmatpush1.msra.mxu0 0.0
    %142 = vmatprep.subr.mxu0 0.0
    %143 = vmatpush1.msra.mxu0 0.0
    %144 = vmatprep.subr.mxu0 0.0
    %145 = vmatpush1.msra.mxu0 0.0
    %146 = vmatprep.subr.mxu0 0.0
    %147 = vmatpush1.msra.mxu0 0.0
    %148 = vmatprep.subr.mxu0 0.0
    %149 = vmatpush1.msra.mxu0 %v109
    %150 = vmatprep.subr.mxu0 0.0
    %151 = vmatpush1.msra.mxu0 %v108
    %152 = vmatprep.subr.mxu0 0.0
    %153 = vmatpush1.msra.mxu0 %v107
    %154 = vmatprep.subr.mxu0 0.0
    %155 = vmatpush1.msra.mxu0 %v106
    %156 = vmatprep.subr.mxu0 0.0
    %157 = vmatpush2.msra.mxu0 0.0
    %158 = vmatprep.subr.mxu0 0.0
    %159 = vmatpush2.msra.mxu0 0.0
    %160 = vmatprep.subr.mxu0 0.0
    %161 = vmatpush2.msra.mxu0 0.0
    %162 = vmatprep.subr.mxu0 0.0
    %163 = vmatpush2.msra.mxu0 0.0
    %164 = vmatprep.subr.mxu0 0.0
    %165 = vmatpush2.msra.mxu0 0.0
    %166 = vmatprep.subr.mxu0 0.0
    %167 = vmatpush2.msra.mxu0 0.0
    %168 = vmatprep.subr.mxu0 0.0
    %169 = vmatpush2.msra.mxu0 0.0
    %170 = vmatprep.subr.mxu0 0.0
    %171 = vmatpush2.msra.mxu0 0.0
    %172 = vmatprep.subr.mxu0 0.0
    %173 = vmatpush2.msra.mxu0 0.0
    %174 = vmatprep.subr.mxu0 0.0
    %175 = vmatpush2.msra.mxu0 0.0
    %176 = vmatprep.subr.mxu0 0.0
    %177 = vmatpush2.msra.mxu0 0.0
    %178 = vmatprep.subr.mxu0 0.0
    %179 = vmatpush2.msra.mxu0 0.0
    %180 = vmatprep.subr.mxu0 0.0
    %181 = vmatpush2.msra.mxu0 0.0
    %182 = vmatprep.subr.mxu0 0.0
    %183 = vmatpush2.msra.mxu0 0.0
    %184 = vmatprep.subr.mxu0 0.0
    %185 = vmatpush2.msra.mxu0 0.0
    %186 = vmatprep.subr.mxu0 0.0
    %187 = vmatpush2.msra.mxu0 0.0
    %188 = vmatprep.mubr.f32.mxu0 0.0
    %189 = vmatmul.mubr.f32.gmra.mxu0 %v122
    %v190 = vpop.f32.mrf.mxu0
    %v191 = vadd.f32 %v115, %v190
    %v192 = vpop.f32.mrf.mxu0
    %193 = vdwg.mxu0
    %v194 = vcvt.f32.s32.ties.to.even %v191
    %195 = vst [vmem:[#allocation8] sm:$0x3] %v194
    // Predicated region
    $region30: #{tpu_custom_call.1} parent=1 // pred_check
      _
    $region31: #{tpu_custom_call.1} parent=1 // pred_check_branch
      %197 = sbr.rel (0) target = $region33
    $region32: #{tpu_custom_call.1} parent=1 // pred_region
      %s199 = ssub.s32 32, 32
      %200 = vsyncadd [#allocation4], %s199
      %s202 = sshll.u32 [#allocation8], 4
      %s203 = int_to_ptr.vmem [resolvable:$true] %s202
      %205 = dma.vmem_to_hbm [thread:$0]  %s203, 32, %s4, [#allocation4]
    $region33: #{tpu_custom_call.1} parent=1 // pred_fallthru
      _
    // Predicated region
    $region34: #{tpu_custom_call.1} parent=1 // pred_check
      _
    $region35: #{tpu_custom_call.1} parent=1 // pred_check_branch
      %207 = sbr.rel (0) target = $region37
    $region36: #{tpu_custom_call.1} parent=1 // pred_region
      %208 = dma.done [#allocation4], 32
    $region37: #{tpu_custom_call.1} parent=1 // pred_fallthru
      _
    %209 = vsyncpa [#allocation3], 1
    %210 = vsyncpa [#allocation6], 1
    %211 = vsyncpa [#allocation4], 1

</llo_original>
